<compile_context>
chip_gen: v7x
topology: tpu7x:2x2x1
jax: 0.10.0
libtpu: 0.0.40
codegen_flags: <defaults>
</compile_context>

<pallas_src>
import jax
import jax.numpy as jnp
from jax import lax
from jax.experimental import pallas as pl
from jax.experimental.pallas import tpu as pltpu


def _make_kernel(normalize, tm):
    def kernel(L_ref, f_ref, out_ref, acc_ref, *scratch):
        r = pl.program_id(1)

        if normalize:
            fn_ref = scratch[0]

            @pl.when(r == 0)
            def _():
                f32 = f_ref[...].astype(jnp.float32)
                ss = jnp.sum(f32 * f32, axis=-1, keepdims=True)
                # F.normalize: x / max(||x||_2, 1e-12) == x * rsqrt(max(||x||^2, 1e-24))
                inv = lax.rsqrt(jnp.maximum(ss, 1e-24))
                fn_ref[...] = (f32 * inv).astype(fn_ref.dtype)

            src_ref = fn_ref
        else:
            src_ref = f_ref

        @pl.when(r == 0)
        def _():
            acc_ref[...] = jnp.zeros_like(acc_ref)

        # MXU matmul in the input dtype (bf16-native if caller supplies bf16),
        # f32 accumulation.
        lf = jnp.dot(L_ref[...], src_ref[...],
                     preferred_element_type=jnp.float32)          # (tm, D) f32

        row0 = pl.multiple_of(r * tm, tm)
        f_rows = src_ref[pl.ds(row0, tm), :].astype(jnp.float32)  # (tm, D) f32

        # Partial de[b, :] for this row tile: sublane reduce only, lane-dense add.
        acc_ref[...] += jnp.sum(f_rows * lf, axis=0, keepdims=True)

        @pl.when(r == pl.num_programs(1) - 1)
        def _():
            out_ref[...] = acc_ref[...]

    return kernel


def _pick_row_tile(n, l_itemsize, vmem_budget_bytes, tile_rows=None):
    """Largest TM (multiple of 8, divides N) whose double-buffered L tile fits
    the budget.  Falls back to TM = N for small / irregular N."""
    if tile_rows is not None and n % tile_rows == 0:
        return int(tile_rows)
    max_rows = vmem_budget_bytes // max(1, 2 * n * l_itemsize)
    cap = int(min(n, 1024, max(8, max_rows)))
    best = None
    for tm in range(8, cap + 1, 8):
        if n % tm == 0:
            best = tm
    return best if best is not None else n


def dirichlet_loss(feats, L, *, normalize=False, loss_weight=1.0, tile_rows=None):
    assert feats.ndim == 3 and L.ndim == 3
    B, N, D = feats.shape
    assert L.shape == (B, N, N)

    f_itemsize = feats.dtype.itemsize
    l_itemsize = L.dtype.itemsize

    try:
        vmem_cap = int(pltpu.get_tpu_info().vmem_capacity_bytes)
    except Exception:
        vmem_cap = 64 * 1024 * 1024  # conservative default (v7x per-TC VMEM)

    tm = _pick_row_tile(N, l_itemsize, vmem_cap // 3, tile_rows)
    assert N % tm == 0
    R = N // tm

    # VMEM needed: double-buffered L tile + double-buffered resident feats block
    # + (optional) normalize scratch + accumulator / output (small).
    needed = (2 * tm * N * l_itemsize
              + 2 * N * D * f_itemsize
              + (N * D * f_itemsize if normalize else 0)
              + 2 * D * 4 + (1 << 16))
    vmem_limit = int(min(max(vmem_cap - (8 << 20), 32 << 20),
                         max(32 << 20, needed + (4 << 20))))

    scratch_shapes = [pltpu.VMEM((1, D), jnp.float32)]
    if normalize:
        scratch_shapes.append(pltpu.VMEM((N, D), feats.dtype))

    cost = pl.CostEstimate(
        flops=2 * B * N * N * D + 3 * B * N * D,
        transcendentals=(B * N) if normalize else 0,
        bytes_accessed=B * N * N * l_itemsize + B * N * D * f_itemsize + B * D * 4,
    )

    de = pl.pallas_call(
        _make_kernel(normalize, tm),
        out_shape=jax.ShapeDtypeStruct((B, 1, D), jnp.float32),
        grid_spec=pltpu.PrefetchScalarGridSpec(
            num_scalar_prefetch=0,
            grid=(B, R),
            in_specs=[
                pl.BlockSpec((None, tm, N), lambda b, r: (b, r, 0)),  # L row tile
                pl.BlockSpec((None, N, D), lambda b, r: (b, 0, 0)),   # feats[b], resident over r
            ],
            out_specs=pl.BlockSpec((None, 1, D), lambda b, r: (b, 0, 0)),
            scratch_shapes=scratch_shapes,
        ),
        compiler_params=pltpu.CompilerParams(
            dimension_semantics=("parallel", "arbitrary"),
            vmem_limit_bytes=vmem_limit,
        ),
        cost_estimate=cost,
    )(L, feats)

    # Tiny final reduction (mean over B*D) + loss_weight in plain JAX so the
    # batch grid axis can stay "parallel" (both TCs on v7x).
    return loss_weight * jnp.mean(de)


def _reference(feats, L, *, normalize=False, loss_weight=1.0):
    f = feats
    if normalize:
        nrm = jnp.sqrt(jnp.sum(f * f, axis=-1, keepdims=True))
        f = f / jnp.maximum(nrm, 1e-12)
    Lf = jnp.einsum("bij,bjd->bid", L, f)
    de = jnp.sum(f * Lf, axis=1)
    return loss_weight * jnp.mean(de)


if __name__ == "__main__":
    key = jax.random.PRNGKey(0)
    kf, kl = jax.random.split(key)

    B, N, D = 2, 16, 32
    feats = jax.random.normal(kf, (B, N, D), dtype=jnp.float32)
    # Symmetric Laplacian-like matrix per batch.
    A = jax.random.normal(kl, (B, N, N), dtype=jnp.float32)
    L = A + jnp.swapaxes(A, 1, 2)

    # f32, no normalize.
    loss = dirichlet_loss(feats, L, normalize=False, loss_weight=1.0)
    jax.block_until_ready(loss)
    ref = _reference(feats, L, normalize=False, loss_weight=1.0)
    assert jnp.allclose(loss, ref, rtol=1e-5, atol=1e-5), (loss, ref)

    # f32, normalize=True path.
    loss_n = dirichlet_loss(feats, L, normalize=True, loss_weight=0.5)
    jax.block_until_ready(loss_n)
    ref_n = _reference(feats, L, normalize=True, loss_weight=0.5)
    assert jnp.allclose(loss_n, ref_n, rtol=1e-5, atol=1e-5), (loss_n, ref_n)

    # Exercise the multi-row-tile accumulation path (R > 1).
    loss_t = dirichlet_loss(feats, L, normalize=True, loss_weight=1.0, tile_rows=8)
    jax.block_until_ready(loss_t)
    ref_t = _reference(feats, L, normalize=True, loss_weight=1.0)
    assert jnp.allclose(loss_t, ref_t, rtol=1e-5, atol=1e-5), (loss_t, ref_t)

    # bf16 inputs: operands stay bf16 on the MXU, f32 accumulate.
    feats_bf = feats.astype(jnp.bfloat16)
    L_bf = L.astype(jnp.bfloat16)
    loss_bf = dirichlet_loss(feats_bf, L_bf, normalize=False, loss_weight=1.0)
    jax.block_until_ready(loss_bf)
    Lf_bf = jnp.einsum("bij,bjd->bid", L_bf, feats_bf,
                       preferred_element_type=jnp.float32)
    ref_bf = jnp.mean(jnp.sum(feats_bf.astype(jnp.float32) * Lf_bf, axis=1))
    assert jnp.allclose(loss_bf, ref_bf, rtol=1e-2, atol=1e-2), (loss_bf, ref_bf)

    print("KERNEL_OK")
</pallas_src>

<mosaic_0001>
module attributes {stable_mosaic.version = 11 : i64} {
  func.func @kernel(%arg0: i32, %arg1: i32, %arg2: memref<1x16x16xf32, #tpu.memory_space<vmem>>, %arg3: memref<1x16x32xf32, #tpu.memory_space<vmem>>, %arg4: memref<1x1x32xf32, #tpu.memory_space<vmem>>, %arg5: memref<1x32xf32, #tpu.memory_space<vmem>>) attributes {dimension_semantics = [#tpu.dimension_semantics<parallel>, #tpu.dimension_semantics<arbitrary>], iteration_bounds = array<i64: 2, 1>, scalar_prefetch = 0 : i64, scratch_operands = 1 : i64, tpu.core_type = #tpu.core_type<tc>, window_params = [{transform_indices = @transform_0, window_bounds = array<i64: 1, 16, 16>}, {transform_indices = @transform_1, window_bounds = array<i64: 1, 16, 32>}, {transform_indices = @transform_2, window_bounds = array<i64: 1, 1, 32>}]} {
    %c0_i32 = arith.constant 0 : i32
    %0 = arith.cmpi eq, %arg1, %c0_i32 : i32
    %1 = arith.extui %0 : i1 to i32
    %c0_i32_0 = arith.constant 0 : i32
    %2 = arith.cmpi ne, %1, %c0_i32_0 : i32
    scf.if %2 {
      %cst_15 = arith.constant 0.000000e+00 : f32
      %22 = vector.broadcast %cst_15 : f32 to vector<1x32xf32>
      %c0_16 = arith.constant 0 : index
      %c0_17 = arith.constant 0 : index
      %23 = vector.load %arg5[%c0_16, %c0_17] : memref<1x32xf32, #tpu.memory_space<vmem>>, vector<1x32xf32>
      tpu.vector_store %arg5[%c0_16, %c0_17], %22 {strides = array<i32>} : memref<1x32xf32, #tpu.memory_space<vmem>>, vector<1x32xf32>,
    } else {
    }
    %c0 = arith.constant 0 : index
    %c0_1 = arith.constant 0 : index
    %c0_2 = arith.constant 0 : index
    %3 = vector.load %arg2[%c0, %c0_1, %c0_2] : memref<1x16x16xf32, #tpu.memory_space<vmem>>, vector<1x16x16xf32>
    %4 = vector.shape_cast %3 : vector<1x16x16xf32> to vector<16x16xf32>
    %c0_3 = arith.constant 0 : index
    %c0_4 = arith.constant 0 : index
    %c0_5 = arith.constant 0 : index
    %5 = vector.load %arg3[%c0_3, %c0_4, %c0_5] : memref<1x16x32xf32, #tpu.memory_space<vmem>>, vector<1x16x32xf32>
    %6 = vector.shape_cast %5 : vector<1x16x32xf32> to vector<16x32xf32>
    %cst = arith.constant dense<0.000000e+00> : vector<16x32xf32>
    %7 = tpu.matmul %4, %6, %cst {dimension_numbers = #tpu.dot_dimension_numbers<[1], [0], [0], [1], [0, 0, 1, 1], [], []>} : vector<16x16xf32>, vector<16x32xf32>, vector<16x32xf32> -> vector<16x32xf32>
    %c16_i32 = arith.constant 16 : i32
    %8 = arith.muli %arg1, %c16_i32 : i32
    %9 = tpu.assume_multiple %8, 16 : i32
    %c0_6 = arith.constant 0 : index
    %10 = arith.index_cast %9 : i32 to index
    %c0_7 = arith.constant 0 : index
    %11 = vector.load %arg3[%c0_6, %10, %c0_7] : memref<1x16x32xf32, #tpu.memory_space<vmem>>, vector<1x16x32xf32>
    %12 = vector.shape_cast %11 : vector<1x16x32xf32> to vector<16x32xf32>
    %c0_8 = arith.constant 0 : index
    %c0_9 = arith.constant 0 : index
    %13 = vector.load %arg5[%c0_8, %c0_9] : memref<1x32xf32, #tpu.memory_space<vmem>>, vector<1x32xf32>
    %14 = arith.mulf %12, %7 : vector<16x32xf32>
    %cst_10 = arith.constant dense<0.000000e+00> : vector<32xf32>
    %15 = vector.multi_reduction <add>, %14, %cst_10 [0] : vector<16x32xf32> to vector<32xf32>
    %16 = vector.shape_cast %15 : vector<32xf32> to vector<1x32xf32>
    %17 = arith.addf %13, %16 : vector<1x32xf32>
    %c0_11 = arith.constant 0 : index
    %c0_12 = arith.constant 0 : index
    %18 = vector.load %arg5[%c0_11, %c0_12] : memref<1x32xf32, #tpu.memory_space<vmem>>, vector<1x32xf32>
    tpu.vector_store %arg5[%c0_11, %c0_12], %17 {strides = array<i32>} : memref<1x32xf32, #tpu.memory_space<vmem>>, vector<1x32xf32>,
    %c0_i32_13 = arith.constant 0 : i32
    %19 = arith.cmpi eq, %arg1, %c0_i32_13 : i32
    %20 = arith.extui %19 : i1 to i32
    %c0_i32_14 = arith.constant 0 : i32
    %21 = arith.cmpi ne, %20, %c0_i32_14 : i32
    scf.if %21 {
      %c0_15 = arith.constant 0 : index
      %c0_16 = arith.constant 0 : index
      %22 = vector.load %arg5[%c0_15, %c0_16] : memref<1x32xf32, #tpu.memory_space<vmem>>, vector<1x32xf32>
      %c0_17 = arith.constant 0 : index
      %c0_18 = arith.constant 0 : index
      %c0_19 = arith.constant 0 : index
      %23 = vector.load %arg4[%c0_17, %c0_18, %c0_19] : memref<1x1x32xf32, #tpu.memory_space<vmem>>, vector<1x1x32xf32>
      %24 = vector.shape_cast %23 : vector<1x1x32xf32> to vector<1x32xf32>
      %25 = vector.shape_cast %22 : vector<1x32xf32> to vector<1x1x32xf32>
      tpu.vector_store %arg4[%c0_17, %c0_18, %c0_19], %25 {strides = array<i32>} : memref<1x1x32xf32, #tpu.memory_space<vmem>>, vector<1x1x32xf32>,
    } else {
    }
    return
  }
  func.func @transform_0(%arg0: i32, %arg1: i32) -> (i32, i32, i32) {
    %c0_i32 = arith.constant 0 : i32
    %c0_i32_0 = arith.constant 0 : i32
    return %arg0, %arg1, %c0_i32 : i32, i32, i32
  }
  func.func @transform_1(%arg0: i32, %arg1: i32) -> (i32, i32, i32) {
    %c0_i32 = arith.constant 0 : i32
    %c0_i32_0 = arith.constant 0 : i32
    %c0_i32_1 = arith.constant 0 : i32
    return %arg0, %c0_i32, %c0_i32_0 : i32, i32, i32
  }
  func.func @transform_2(%arg0: i32, %arg1: i32) -> (i32, i32, i32) {
    %c0_i32 = arith.constant 0 : i32
    %c0_i32_0 = arith.constant 0 : i32
    %c0_i32_1 = arith.constant 0 : i32
    return %arg0, %c0_i32, %c0_i32_0 : i32, i32, i32
  }
}

</mosaic_0001>

<llo_original>
// kernel: tpu_custom_call.1
$region0: #{tpu_custom_call.1}
  #allocation0 [shape = 'u32[]', space=smem, size = 0x4, offset = 0x4, fixed_abs, tag = 'smem constant byte address 0x4 - core index']
  #allocation1 [shape = 'u32[144,128]{1,0:T(1,128)}', space=vmem, size = 0x12000, scoped, tag = 'internal scratch']
  #allocation2 [shape = 'f32[1,32]{1,0:T(1,128)}', space=vmem, size = 0x200, scoped, tag = 'scratch operand']
  %s0 = inlined_call_operand.hbm [shape: f32[2,16,16], index: 0, kind: input, shape index: {}]
  %s1 = inlined_call_operand.hbm [shape: f32[2,16,32], index: 1, kind: input, shape index: {}]
  %s2 = inlined_call_operand.hbm [shape: f32[2,1,32], index: 2, kind: output, shape index: {}]
  %s3 = sld [smem:[#allocation0]]
  $region57: #{tpu_custom_call.1} parent=0
    _
  %s5 = ssub.s32 1, %s3
  %s6 = scalar_select 0, %s5, %s3
  $region1: #{tpu_custom_call.1} parent=0
    #allocation3 [shape = 'u8[16384]{0}', space=vmem, size = 0x4000, scoped, tag = 'input window, operand 0']
    #allocation4 [shape = 's32[2]{0}', space=sflag, size = 0x8, scoped, tag = 'scoped memory for tpu_custom_call.1']
    #allocation5 [shape = 's32[2]{0}', space=sflag, size = 0x8, scoped, tag = 'scoped memory for tpu_custom_call.1']
    #allocation6 [shape = 'u8[16384]{0}', space=vmem, size = 0x4000, scoped, tag = 'input window, operand 1']
    #allocation7 [shape = 's32[2]{0}', space=sflag, size = 0x8, scoped, tag = 'scoped memory for tpu_custom_call.1']
    #allocation8 [shape = 'u8[1024]{0}', space=vmem, size = 0x400, scoped, tag = 'output window, operand 0']
    %7 = vsyncpa [#allocation4], 0
    %s8 = scalar_lea.sflag [#allocation4], 1
    %9 = vsyncpa %s8, 0
    %10 = vsyncpa [#allocation7], 0
    %s11 = scalar_lea.sflag [#allocation7], 1
    %12 = vsyncpa %s11, 0
    %13 = vsyncpa [#allocation5], 0
    %s14 = scalar_lea.sflag [#allocation5], 1
    %15 = vsyncpa %s14, 0
    loop: start=0, step=1, limit=4
    $region2: #{tpu_custom_call.1} parent=1 // loop_pre_header
      _
    $region3: #{tpu_custom_call.1} parent=1 // loop_header
      %s17 = sphi 0, %s21
      %p18 = scmp.ge.s32.totalorder %s17, 4
      %s24 = sphi 0, %s36
      %s25 = sphi 0, %s32
      %s26 = sphi 0, %s24
      %s27 = sphi 0, %s25
      %s28 = sphi 0, %s26
      %s29 = sphi 0, %s27
      %s41 = sphi 0, %s43
      %s44 = sphi 0, %s41
      %s45 = sphi 0, %s44
      %s61 = sphi 0, %s45
      %s67 = sphi 0, %s69
      %s70 = sphi 0, %s67
      %s71 = sphi 0, %s70
      %s87 = sphi 0, %s71
      %s93 = sphi 0, %s95
      %s96 = sphi 0, %s93
      %s97 = sphi 0, %s96
      %s113 = sphi 0, %s97
    $region4: #{tpu_custom_call.1} parent=1 // loop_header_branch
      %20 = sbr.rel (%p18) target = $region8
    $region5: #{tpu_custom_call.1} parent=1 // loop_body
      %s22 = ssub.s32 %s17, 1
      %s23 = ssub.s32 %s17, 2
      %s30 = sadd.s32 1, %s25
      %p31 = scmp.ge.s32.totalorder %s30, 1
      %s32 = scalar_select %p31, 0, %s30
      %s33 = sadd.s32 1, %s24
      %s34 = scalar_select %p31, %s33, %s24
      %p35 = scmp.ge.s32.totalorder %s34, 2
      %s36 = scalar_select %p35, 0, %s34
      %s37 = ssub.s32 %s24, %s36
      %s38 = ssub.s32 %s25, %s32
      %s39 = sor.u32 %s37, %s38
      %p40 = scmp.eq.s32.totalorder %s39, 0
      %s42 = sadd.s32 %s41, 1
      %s43 = scalar_select %p40, %s41, %s42
      %p46 = pneg %p40
      %p47 = scmp.eq.s32.totalorder %s17, 1
      %p48 = por %p46, %p47
      %p49 = scmp.ne.s32.totalorder %s41, %s44
      %p50 = scmp.eq.s32.totalorder %s17, 0
      %p51 = por %p49, %p50
      %p52 = scmp.ne.s32.totalorder %s41, %s44
      %p53 = scmp.eq.s32.totalorder %s22, 1
      %p54 = por %p52, %p53
      %p55 = scmp.ne.s32.totalorder %s44, %s45
      %p56 = scmp.eq.s32.totalorder %s22, 0
      %p57 = por %p55, %p56
      %p58 = scmp.ne.s32.totalorder %s44, %s45
      %p59 = scmp.eq.s32.totalorder %s23, 1
      %p60 = por %p58, %p59
      %p62 = scmp.ne.s32.totalorder %s45, %s61
      %p63 = scmp.eq.s32.totalorder %s23, 0
      %p64 = por %p62, %p63
      %s65 = ssub.s32 %s24, %s36
      %p66 = scmp.eq.s32.totalorder %s65, 0
      %s68 = sadd.s32 %s67, 1
      %s69 = scalar_select %p66, %s67, %s68
      %p72 = pneg %p66
      %p73 = scmp.eq.s32.totalorder %s17, 1
      %p74 = por %p72, %p73
      %p75 = scmp.ne.s32.totalorder %s67, %s70
      %p76 = scmp.eq.s32.totalorder %s17, 0
      %p77 = por %p75, %p76
      %p78 = scmp.ne.s32.totalorder %s67, %s70
      %p79 = scmp.eq.s32.totalorder %s22, 1
      %p80 = por %p78, %p79
      %p81 = scmp.ne.s32.totalorder %s70, %s71
      %p82 = scmp.eq.s32.totalorder %s22, 0
      %p83 = por %p81, %p82
      %p84 = scmp.ne.s32.totalorder %s70, %s71
      %p85 = scmp.eq.s32.totalorder %s23, 1
      %p86 = por %p84, %p85
      %p88 = scmp.ne.s32.totalorder %s71, %s87
      %p89 = scmp.eq.s32.totalorder %s23, 0
      %p90 = por %p88, %p89
      %s91 = ssub.s32 %s24, %s36
      %p92 = scmp.eq.s32.totalorder %s91, 0
      %s94 = sadd.s32 %s93, 1
      %s95 = scalar_select %p92, %s93, %s94
      %p98 = pneg %p92
      %p99 = scmp.eq.s32.totalorder %s17, 1
      %p100 = por %p98, %p99
      %p101 = scmp.ne.s32.totalorder %s93, %s96
      %p102 = scmp.eq.s32.totalorder %s17, 0
      %p103 = por %p101, %p102
      %p104 = scmp.ne.s32.totalorder %s93, %s96
      %p105 = scmp.eq.s32.totalorder %s22, 1
      %p106 = por %p104, %p105
      %p107 = scmp.ne.s32.totalorder %s96, %s97
      %p108 = scmp.eq.s32.totalorder %s22, 0
      %p109 = por %p107, %p108
      %p110 = scmp.ne.s32.totalorder %s96, %s97
      %p111 = scmp.eq.s32.totalorder %s23, 1
      %p112 = por %p110, %p111
      %p114 = scmp.ne.s32.totalorder %s97, %s113
      %p115 = scmp.eq.s32.totalorder %s23, 0
      %p116 = por %p114, %p115
      %p117 = scmp.le.s32.totalorder 1, %s17
      %p118 = scmp.lt.s32.totalorder %s17, 3
      %p119 = pnand %p117, %p118
      %p120 = pneg %p119
      // Predicated region
      $region9: #{tpu_custom_call.1} parent=5 // pred_check
        _
      $region10: #{tpu_custom_call.1} parent=5 // pred_check_branch
        %122 = sbr.rel (%p119) target = $region12
      $region11: #{tpu_custom_call.1} parent=5 // pred_region
        %s123 = ssub.s32 %s17, 1
      $region12: #{tpu_custom_call.1} parent=5 // pred_fallthru
        _
      %p124 = scmp.lt.s32.totalorder %s17, 2
      // Predicated region
      $region13: #{tpu_custom_call.1} parent=5 // pred_check
        %p125 = pneg %p124
      $region14: #{tpu_custom_call.1} parent=5 // pred_check_branch
        %127 = sbr.rel (%p125) target = $region16
      $region15: #{tpu_custom_call.1} parent=5 // pred_region
        // Predicated region
        $region17: #{tpu_custom_call.1} parent=15 // pred_check
          %p128 = pneg %p51
        $region18: #{tpu_custom_call.1} parent=15 // pred_check_branch
          %130 = sbr.rel (%p128) target = $region20
        $region19: #{tpu_custom_call.1} parent=15 // pred_region
          %s131 = sand.u32 %s41, 1
          %s132 = scalar_lea.sflag [#allocation4], %s131
          %s133 = sand.u32 %s41, 1
          %s134 = smul.addr %s133, 16
          %s135 = scalar_lea.vmem [#allocation3], %s134
          %s136 = smul.u32 2, %s25
          %s138 = ssub.s32 256, 256
          %139 = vsyncadd %s132, %s138
          %s140 = smul.addr %s24, 2
          %s141 = sadd.s32 %s136, %s140
          %s142 = smul.addr %s141, 128
          %s143 = scalar_lea.hbm %s0, %s142
          %s144 = sshll.u32 %s135, 4
          %s145 = int_to_ptr.vmem [resolvable:$true] %s144
          %150 = dma.hbm_to_vmem [thread:$0]  %s143, 256, %s145, %s132, 128, 128, 8
        $region20: #{tpu_custom_call.1} parent=15 // pred_fallthru
          _
        // Predicated region
        $region21: #{tpu_custom_call.1} parent=15 // pred_check
          %p151 = pneg %p77
        $region22: #{tpu_custom_call.1} parent=15 // pred_check_branch
          %153 = sbr.rel (%p151) target = $region24
        $region23: #{tpu_custom_call.1} parent=15 // pred_region
          %s154 = sand.u32 %s67, 1
          %s155 = scalar_lea.sflag [#allocation7], %s154
          %s156 = sand.u32 %s67, 1
          %s157 = smul.addr %s156, 16
          %s158 = scalar_lea.vmem [#allocation6], %s157
          %s160 = ssub.s32 256, 256
          %161 = vsyncadd %s155, %s160
          %s162 = smul.addr %s24, 2
          %s163 = smul.addr %s162, 128
          %s164 = scalar_lea.hbm %s1, %s163
          %s165 = sshll.u32 %s158, 4
          %s166 = int_to_ptr.vmem [resolvable:$true] %s165
          %171 = dma.hbm_to_vmem [thread:$0]  %s164, 256, %s166, %s155, 128, 128, 8
        $region24: #{tpu_custom_call.1} parent=15 // pred_fallthru
          _
      $region16: #{tpu_custom_call.1} parent=5 // pred_fallthru
        _
      %p172 = scmp.le.s32.totalorder 1, %s17
      %p173 = scmp.lt.s32.totalorder %s17, 3
      %p174 = pnand %p172, %p173
      %p175 = pneg %p174
      // Predicated region
      $region25: #{tpu_custom_call.1} parent=5 // pred_check
        _
      $region26: #{tpu_custom_call.1} parent=5 // pred_check_branch
        %177 = sbr.rel (%p174) target = $region28
      $region27: #{tpu_custom_call.1} parent=5 // pred_region
        %s178 = ssub.s32 %s17, 1
        %s179 = sand.u32 %s44, 1
        %s180 = scalar_lea.sflag [#allocation4], %s179
        %s181 = sand.u32 %s44, 1
        %s182 = smul.addr %s181, 16
        %s183 = scalar_lea.vmem [#allocation3], %s182
        // Predicated region
        $region29: #{tpu_custom_call.1} parent=27 // pred_check
          %p184 = pneg %p57
        $region30: #{tpu_custom_call.1} parent=27 // pred_check_branch
          %186 = sbr.rel (%p184) target = $region32
        $region31: #{tpu_custom_call.1} parent=27 // pred_region
          %187 = dma.done %s180, 256
        $region32: #{tpu_custom_call.1} parent=27 // pred_fallthru
          _
        %s188 = sand.u32 %s70, 1
        %s189 = scalar_lea.sflag [#allocation7], %s188
        %s190 = sand.u32 %s70, 1
        %s191 = smul.addr %s190, 16
        %s192 = scalar_lea.vmem [#allocation6], %s191
        // Predicated region
        $region33: #{tpu_custom_call.1} parent=27 // pred_check
          %p193 = pneg %p83
        $region34: #{tpu_custom_call.1} parent=27 // pred_check_branch
          %195 = sbr.rel (%p193) target = $region36
        $region35: #{tpu_custom_call.1} parent=27 // pred_region
          %196 = dma.done %s189, 256
        $region36: #{tpu_custom_call.1} parent=27 // pred_fallthru
          _
        %s197 = sand.u32 %s44, 1
        %s198 = scalar_lea.sflag [#allocation4], %s197
        %s199 = sand.u32 %s44, 1
        %s200 = smul.addr %s199, 16
        %s201 = scalar_lea.vmem [#allocation3], %s200
        %p202 = pneg %p57
        %p203 = pneg %p54
        %s204 = sand.u32 %s70, 1
        %s205 = scalar_lea.sflag [#allocation7], %s204
        %s206 = sand.u32 %s70, 1
        %s207 = smul.addr %s206, 16
        %s208 = scalar_lea.vmem [#allocation6], %s207
        %p209 = pneg %p83
        %p210 = pneg %p80
        %p211 = pneg %p109
        %p212 = pneg %p106
        %s213 = sand.u32 %s96, 1
        %s214 = scalar_lea.sflag [#allocation5], %s213
        %s215 = sand.u32 %s96, 1
        %s216 = scalar_lea.vmem [#allocation8], %s215
        %s217 = smul.u32 2, %s27
        %p218 = scmp.eq.s32.totalorder %s27, 0
        // Predicated region
        $region37: #{tpu_custom_call.1} parent=27 // pred_check
          %p219 = pneg %p218
        $region38: #{tpu_custom_call.1} parent=27 // pred_check_branch
          %221 = sbr.rel (%p219) target = $region40
        $region39: #{tpu_custom_call.1} parent=27 // pred_region
          %vm222 = vcmask 253952
          %223 = vst.msk [vmem:[#allocation2] sm:$0x1] %vm222, 0.0
        $region40: #{tpu_custom_call.1} parent=27 // pred_fallthru
          _
        %v224 = vld [vmem:[%s183] sm:$0xff]
        %v225 = vld [vmem:[%s183 + $0x8] sm:$0xff]
        %v226 = vld [vmem:[%s192] sm:$0xff]
        %v227 = vld [vmem:[%s192 + $0x8] sm:$0xff]
        %vm228 = vcmask 130048
        %v230 = vsel %vm228, %v224, 0
        %v233 = vsel %vm228, %v225, 0
        %235 = vmatprep.subr.mxu0 0.0
        %236 = vmatpush1.msra.mxu0 %v226
        %237 = vmatprep.subr.mxu0 0.0
        %238 = vmatpush1.msra.mxu0 %v227
        %239 = vmatprep.subr.mxu0 0.0
        %240 = vmatpush1.msra.mxu0 0.0
        %241 = vmatprep.subr.mxu0 0.0
        %242 = vmatpush1.msra.mxu0 0.0
        %243 = vmatprep.subr.mxu0 0.0
        %244 = vmatpush1.msra.mxu0 0.0
        %245 = vmatprep.subr.mxu0 0.0
        %246 = vmatpush1.msra.mxu0 0.0
        %247 = vmatprep.subr.mxu0 0.0
        %248 = vmatpush1.msra.mxu0 0.0
        %249 = vmatprep.subr.mxu0 0.0
        %250 = vmatpush1.msra.mxu0 0.0
        %251 = vmatprep.subr.mxu0 0.0
        %252 = vmatpush1.msra.mxu0 0.0
        %253 = vmatprep.subr.mxu0 0.0
        %254 = vmatpush1.msra.mxu0 0.0
        %255 = vmatprep.subr.mxu0 0.0
        %256 = vmatpush1.msra.mxu0 0.0
        %257 = vmatprep.subr.mxu0 0.0
        %258 = vmatpush1.msra.mxu0 0.0
        %259 = vmatprep.subr.mxu0 0.0
        %260 = vmatpush1.msra.mxu0 0.0
        %261 = vmatprep.subr.mxu0 0.0
        %262 = vmatpush1.msra.mxu0 0.0
        %263 = vmatprep.subr.mxu0 0.0
        %264 = vmatpush1.msra.mxu0 0.0
        %265 = vmatprep.subr.mxu0 0.0
        %266 = vmatpush1.msra.mxu0 0.0
        %267 = vmatprep.subr.mxu0 0.0
        %268 = vmatpush1.msra.mxu0 0.0
        %269 = vmatprep.subr.mxu0 0.0
        %270 = vmatpush1.msra.mxu0 0.0
        %271 = vmatprep.subr.mxu0 0.0
        %272 = vmatpush1.msra.mxu0 0.0
        %273 = vmatprep.subr.mxu0 0.0
        %274 = vmatpush1.msra.mxu0 0.0
        %275 = vmatprep.subr.mxu0 0.0
        %276 = vmatpush1.msra.mxu0 0.0
        %277 = vmatprep.subr.mxu0 0.0
        %278 = vmatpush1.msra.mxu0 0.0
        %279 = vmatprep.subr.mxu0 0.0
        %280 = vmatpush1.msra.mxu0 0.0
        %281 = vmatprep.subr.mxu0 0.0
        %282 = vmatpush1.msra.mxu0 0.0
        %283 = vmatprep.subr.mxu0 0.0
        %284 = vmatpush1.msra.mxu0 0.0
        %285 = vmatprep.subr.mxu0 0.0
        %286 = vmatpush1.msra.mxu0 0.0
        %287 = vmatprep.subr.mxu0 0.0
        %288 = vmatpush1.msra.mxu0 0.0
        %289 = vmatprep.subr.mxu0 0.0
        %290 = vmatpush1.msra.mxu0 0.0
        %291 = vmatprep.subr.mxu0 0.0
        %292 = vmatpush1.msra.mxu0 0.0
        %293 = vmatprep.subr.mxu0 0.0
        %294 = vmatpush1.msra.mxu0 0.0
        %295 = vmatprep.subr.mxu0 0.0
        %296 = vmatpush1.msra.mxu0 0.0
        %297 = vmatprep.subr.mxu0 0.0
        %298 = vmatpush1.msra.mxu0 0.0
        %299 = vmatprep.mubr.f32.mxu0 0.0
        %300 = vmatmul.mubr.f32.gmra.mrb[0].mxu0 %v230
        %v301 = vpop.f32.mrb[0].mxu0
        %v302 = vadd.f32 0.0, %v301
        %v303 = vpop.f32.mrb[0].mxu0
        %304 = vmatprep.mubr.f32.mxu0 0.0
        %305 = vmatmul.mubr.f32.gmra.mrb[0].mxu0 %v233
        %v306 = vpop.f32.mrb[0].mxu0
        %v307 = vadd.f32 0.0, %v306
        %v308 = vpop.f32.mrb[0].mxu0
        %309 = vdwg.mxu0
        %s310 = smul.u32 %s27, 16
        %s311 = scalar_lea.vmem %s192, %s310 [#allocation6]
        %v312 = vld [vmem:[%s311] sm:$0xff]
        %v313 = vld [vmem:[%s311 + $0x8] sm:$0xff]
        %v314 = vld [vmem:[#allocation2] sm:$0x1]
        %v315 = vmul.f32 %v312, %v302
        %v316 = vmul.f32 %v313, %v307
        %vm317 = vcmask 261120
        %v318 = vsel %vm317, %v315, 0.0
        %v319 = vsel %vm317, %v316, 0.0
        %v320 = vadd.f32 %v318, %v319
        %v321 = vrot.slane %v320, 4
        %v322 = vadd.f32 %v320, %v321
        %v323 = vrot.slane %v322, 2
        %v324 = vadd.f32 %v322, %v323
        %v325 = vrot.slane %v324, 1
        %v326 = vadd.f32 %v324, %v325
        %v327 = vadd.f32 %v314, %v326
        %vm328 = vcmask 253952
        %329 = vst.msk [vmem:[#allocation2] sm:$0x1] %vm328, %v327
        // Predicated region
        $region41: #{tpu_custom_call.1} parent=27 // pred_check
          %p330 = pneg %p218
        $region42: #{tpu_custom_call.1} parent=27 // pred_check_branch
          %332 = sbr.rel (%p330) target = $region44
        $region43: #{tpu_custom_call.1} parent=27 // pred_region
          %v333 = vld [vmem:[#allocation2] sm:$0x1]
          %334 = vst.msk [vmem:[%s216] sm:$0x1] %vm328, %v333
        $region44: #{tpu_custom_call.1} parent=27 // pred_fallthru
          _
        %s335 = sand.u32 %s96, 1
        %s336 = scalar_lea.sflag [#allocation5], %s335
        %s337 = sand.u32 %s96, 1
        %s338 = scalar_lea.vmem [#allocation8], %s337
        // Predicated region
        $region45: #{tpu_custom_call.1} parent=27 // pred_check
          %p339 = pneg %p106
        $region46: #{tpu_custom_call.1} parent=27 // pred_check_branch
          %341 = sbr.rel (%p339) target = $region48
        $region47: #{tpu_custom_call.1} parent=27 // pred_region
          %s343 = ssub.s32 16, 16
          %344 = vsyncadd %s336, %s343
          %s345 = smul.addr %s26, 16
          %s346 = scalar_lea.hbm %s2, %s345
          %s348 = sshll.u32 %s338, 4
          %s349 = int_to_ptr.vmem [resolvable:$true] %s348
          %351 = dma.vmem_to_hbm [thread:$0]  %s349, 16, %s346, %s336
        $region48: #{tpu_custom_call.1} parent=27 // pred_fallthru
          _
      $region28: #{tpu_custom_call.1} parent=5 // pred_fallthru
        _
      %p352 = scmp.le.s32.totalorder 2, %s17
      // Predicated region
      $region49: #{tpu_custom_call.1} parent=5 // pred_check
        %p353 = pneg %p352
      $region50: #{tpu_custom_call.1} parent=5 // pred_check_branch
        %355 = sbr.rel (%p353) target = $region52
      $region51: #{tpu_custom_call.1} parent=5 // pred_region
        %s356 = ssub.s32 %s17, 2
        // Predicated region
        $region53: #{tpu_custom_call.1} parent=51 // pred_check
          %p357 = pneg %p112
        $region54: #{tpu_custom_call.1} parent=51 // pred_check_branch
          %359 = sbr.rel (%p357) target = $region56
        $region55: #{tpu_custom_call.1} parent=51 // pred_region
          %s360 = sand.u32 %s97, 1
          %s361 = scalar_lea.sflag [#allocation5], %s360
          %s362 = sand.u32 %s97, 1
          %s363 = scalar_lea.vmem [#allocation8], %s362
          %364 = dma.done %s361, 16
        $region56: #{tpu_custom_call.1} parent=51 // pred_fallthru
          _
      $region52: #{tpu_custom_call.1} parent=5 // pred_fallthru
        _
    $region6: #{tpu_custom_call.1} parent=1 // loop_footer
      %s21 = sadd.s32 1, %s17
    $region7: #{tpu_custom_call.1} parent=1 // loop_footer_branch
      %16 = sbr.rel target = $region3
    $region8: #{tpu_custom_call.1} parent=1 // loop_exit
      _
    %365 = vsyncpa [#allocation4], 1
    %s366 = scalar_lea.sflag [#allocation4], 1
    %367 = vsyncpa %s366, 1
    %368 = vsyncpa [#allocation7], 1
    %s369 = scalar_lea.sflag [#allocation7], 1
    %370 = vsyncpa %s369, 1
    %371 = vsyncpa [#allocation5], 1
    %s372 = scalar_lea.sflag [#allocation5], 1
    %373 = vsyncpa %s372, 1

</llo_original>
